<compile_context>
chip_gen: v5e
topology: v5e:2x2
jax: 0.10.0
libtpu: 0.0.40
codegen_flags: <defaults>
</compile_context>

<pallas_src>
import functools

import jax
import jax.numpy as jnp
from jax.experimental import pallas as pl
from jax.experimental.pallas import tpu as pltpu

_LANES = 128
_MAX_MOMENTS = 16  # moment loop is fully unrolled; keep code size / VMEM honest


def _round_up(x, m):
    return (x + m - 1) // m * m


def _vmem_budget_bytes():
    """Generation-aware scoped-VMEM budget (~3/4 of physical, max 96 MiB)."""
    try:
        cap = int(pltpu.get_tpu_info().vmem_capacity_bytes)
    except Exception:  # pragma: no cover - conservative fallback (v7x-safe)
        cap = 64 << 20
    return int(min((cap * 3) // 4, 96 << 20))


def _choose_tile(n, d, in_itemsize, budget_bytes):
    """Largest lane-aligned feature tile whose live working set fits budget.

    Live per-column bytes: 2 inputs x 2 pipeline buffers at the input dtype,
    plus ~6 f32 working tensors (upcast/centered copies, running products,
    temporaries).  Returns (tile_d, padded_D).
    """
    per_col = n * (4 * in_itemsize + 6 * 4)
    max_cols = max(budget_bytes // per_col, 1)
    if d <= max_cols:
        return d, d  # single full-width block (legal for any D, incl. D%128!=0)
    d_pad = _round_up(d, _LANES)
    tile = max((max_cols // _LANES) * _LANES, _LANES)
    tile = min(tile, d_pad)
    # Largest 128-multiple <= budget tile that divides the (padded) D; 128
    # always divides d_pad, so the loop terminates.
    while tile > _LANES and d_pad % tile != 0:
        tile -= _LANES
    return tile, d_pad


def _cmd_kernel(x1_ref, x2_ref, out_ref, *, n_moments, tiles_per_split,
                num_tiles, use_mxu):
    c = pl.program_id(0)  # split (parallel) axis
    j = pl.program_id(1)  # feature-tile (reduction) axis

    # Zero this split's resident accumulator block at the start of its j-loop.
    @pl.when(j == 0)
    def _():
        out_ref[...] = jnp.zeros_like(out_ref)

    # Skip the clamped tail tile when the tile count does not split evenly.
    @pl.when(c * tiles_per_split + j < num_tiles)
    def _():
        x1 = x1_ref[...].astype(jnp.float32)          # [N, TILE_D]
        x2 = x2_ref[...].astype(jnp.float32)
        n = x1.shape[0]
        inv_n = 1.0 / n

        if use_mxu:
            # Column sums on the (otherwise idle) MXU: ones(1,N) @ x.
            ones_row = jnp.ones((1, n), dtype=jnp.float32)

            def colsum(a):
                return jnp.dot(ones_row, a, preferred_element_type=jnp.float32)
        else:
            def colsum(a):
                return jnp.sum(a, axis=0, keepdims=True)

        mx1 = colsum(x1) * inv_n                       # [1, TILE_D]
        mx2 = colsum(x2) * inv_n
        sx1 = x1 - mx1                                 # centered samples
        sx2 = x2 - mx2

        d0 = mx1 - mx2
        rows = [d0 * d0]                               # 1st moment (means)

        # Central moments k = 2..n_moments via running products (O(K) muls).
        p1, p2 = sx1, sx2
        for _m in range(1, n_moments):
            p1 = p1 * sx1                              # p1 == sx1 ** (k)
            p2 = p2 * sx2
            dk = (colsum(p1) - colsum(p2)) * inv_n     # ss1 - ss2
            rows.append(dk * dk)

        # One cross-lane reduction for all K moments at once.
        stacked = jnp.concatenate(rows, axis=0)        # [K, TILE_D]
        partial = jnp.sum(stacked, axis=1, keepdims=True)  # [K, 1] partial SSQ
        out_ref[...] += partial[None]                  # [1, K, 1]


def cmd(x1, x2, n_moments, *, tile_d=None):
    """Pallas CMD loss. x1, x2: [N, D] (f32 or bf16); n_moments: static int.

    `tile_d` is an optional tuning/test hook forcing the feature tile width.
    """
    assert x1.shape == x2.shape and x1.ndim == 2
    assert x1.dtype == x2.dtype
    n_moments = int(n_moments)
    assert 1 <= n_moments <= _MAX_MOMENTS
    N, D = x1.shape
    itemsize = jnp.dtype(x1.dtype).itemsize

    budget = _vmem_budget_bytes()
    if tile_d is None:
        tile_d, d_pad = _choose_tile(N, D, itemsize, budget)
    else:
        tile_d = int(tile_d)
        if tile_d >= D:
            tile_d, d_pad = D, D
        else:
            assert tile_d % _LANES == 0
            d_pad = _round_up(D, tile_d)

    if d_pad != D:
        # Identical zero padding on BOTH inputs contributes exactly 0 to every
        # moment SSQ (zero columns have zero means and zero central moments).
        pad = ((0, 0), (0, d_pad - D))
        x1 = jnp.pad(x1, pad)
        x2 = jnp.pad(x2, pad)

    num_tiles = d_pad // tile_d
    num_splits = 2 if num_tiles >= 2 else 1           # 2-TC split on v7x
    tiles_per_split = pl.cdiv(num_tiles, num_splits)

    use_mxu = N >= 128                                 # MXU column sums only
                                                       # when the batch is big
    kernel = functools.partial(
        _cmd_kernel, n_moments=n_moments, tiles_per_split=tiles_per_split,
        num_tiles=num_tiles, use_mxu=use_mxu)

    def in_map(c, j):
        # Clamp the tail step of an uneven split to a valid tile; the kernel
        # skips its contribution under pl.when.
        t = jnp.minimum(c * tiles_per_split + j, num_tiles - 1)
        return (0, t)

    # Resident footprint -> explicit scoped-VMEM limit (documents the budget;
    # capped at the generation-aware budget, so always below physical VMEM).
    est_bytes = 4 * N * tile_d * itemsize + 6 * N * tile_d * 4 + (2 << 20)
    vmem_limit = int(min(max(est_bytes, 16 << 20), budget))

    cost = pl.CostEstimate(
        flops=int(4 * n_moments * N * d_pad),
        bytes_accessed=int(2 * N * d_pad * itemsize),
        transcendentals=0)

    partials = pl.pallas_call(
        kernel,
        out_shape=jax.ShapeDtypeStruct((num_splits, n_moments, 1), jnp.float32),
        grid=(num_splits, tiles_per_split),
        in_specs=[
            pl.BlockSpec((N, tile_d), in_map),
            pl.BlockSpec((N, tile_d), in_map),
        ],
        out_specs=pl.BlockSpec((1, n_moments, 1), lambda c, j: (c, 0, 0)),
        compiler_params=pltpu.CompilerParams(
            dimension_semantics=("parallel", "arbitrary"),
            vmem_limit_bytes=vmem_limit,
        ),
        cost_estimate=cost,
    )(x1, x2)

    # Tiny epilogue: combine per-split partial SSQs, then per-moment sqrt, sum
    # and scale.  sqrt must see the grid-wide sums, so it lives here.
    ssq = jnp.sum(partials[:, :, 0], axis=0)           # (n_moments,)
    return jnp.sum(jnp.sqrt(ssq)) * 0.01


def _cmd_reference(x1, x2, n_moments):
    """Pure-JAX reference mirroring the PyTorch forward exactly."""
    mx1 = jnp.mean(x1, axis=0)
    mx2 = jnp.mean(x2, axis=0)
    sx1 = x1 - mx1
    sx2 = x2 - mx2

    def matchnorm(a, b):
        return jnp.sum((a - b) ** 2) ** 0.5

    scms = matchnorm(mx1, mx2)
    for i in range(n_moments - 1):
        k = i + 2
        ss1 = jnp.mean(sx1 ** k, axis=0)
        ss2 = jnp.mean(sx2 ** k, axis=0)
        scms = scms + matchnorm(ss1, ss2)
    return scms * 0.01


if __name__ == "__main__":
    key = jax.random.PRNGKey(0)
    ks = jax.random.split(key, 8)
    K = 5

    # 1) Module-scale config (batch=8, hidden=32): single full-width block.
    x1 = jax.random.normal(ks[0], (8, 32), dtype=jnp.float32)
    x2 = jax.random.normal(ks[1], (8, 32), dtype=jnp.float32) * 1.3 + 0.2
    out = jax.block_until_ready(cmd(x1, x2, K))
    ref = _cmd_reference(x1, x2, K)
    assert jnp.allclose(out, ref, rtol=1e-4, atol=1e-5), (out, ref)

    # 2) Tiled + 2-way split path (tile override keeps the test small):
    #    D=2048 with tile 512 -> 4 tiles, 2 splits of 2.
    y1 = jax.random.normal(ks[2], (16, 2048), dtype=jnp.float32)
    y2 = jax.random.normal(ks[3], (16, 2048), dtype=jnp.float32) * 0.9 - 0.1
    out2 = jax.block_until_ready(cmd(y1, y2, K, tile_d=512))
    ref2 = _cmd_reference(y1, y2, K)
    assert jnp.allclose(out2, ref2, rtol=1e-3, atol=1e-4), (out2, ref2)

    # 3) Odd tile count + zero-padded D + clamped/skipped tail tile:
    #    D=1152 -> padded to 1536, tile 512 -> 3 tiles over 2 splits.
    z1 = jax.random.normal(ks[4], (8, 1152), dtype=jnp.float32)
    z2 = jax.random.normal(ks[5], (8, 1152), dtype=jnp.float32) * 1.1 + 0.05
    out3 = jax.block_until_ready(cmd(z1, z2, K, tile_d=512))
    ref3 = _cmd_reference(z1, z2, K)
    assert jnp.allclose(out3, ref3, rtol=1e-3, atol=1e-4), (out3, ref3)

    # 4) MXU column-sum path (N >= 128), f32.
    w1 = jax.random.normal(ks[6], (256, 256), dtype=jnp.float32)
    w2 = jax.random.normal(ks[7], (256, 256), dtype=jnp.float32) * 0.8 + 0.1
    out4 = jax.block_until_ready(cmd(w1, w2, K))
    ref4 = _cmd_reference(w1, w2, K)
    assert jnp.allclose(out4, ref4, rtol=1e-3, atol=1e-4), (out4, ref4)

    # 5) bf16 streaming path (reference computed on the bf16-rounded inputs).
    b1 = w1.astype(jnp.bfloat16)
    b2 = w2.astype(jnp.bfloat16)
    out5 = jax.block_until_ready(cmd(b1, b2, K))
    ref5 = _cmd_reference(b1.astype(jnp.float32), b2.astype(jnp.float32), K)
    assert jnp.allclose(out5, ref5, rtol=2e-3, atol=1e-3), (out5, ref5)

    print("KERNEL_OK")
</pallas_src>

<mosaic_0001>
module attributes {stable_mosaic.version = 11 : i64} {
  func.func @_cmd_kernel(%arg0: i32, %arg1: i32, %arg2: memref<8x32xf32, #tpu.memory_space<vmem>>, %arg3: memref<8x32xf32, #tpu.memory_space<vmem>>, %arg4: memref<1x5x1xf32, #tpu.memory_space<vmem>>) attributes {dimension_semantics = [#tpu.dimension_semantics<parallel>, #tpu.dimension_semantics<arbitrary>], iteration_bounds = array<i64: 1, 1>, scalar_prefetch = 0 : i64, scratch_operands = 0 : i64, tpu.core_type = #tpu.core_type<tc>, window_params = [{transform_indices = @transform_0, window_bounds = array<i64: 8, 32>}, {transform_indices = @transform_1, window_bounds = array<i64: 8, 32>}, {transform_indices = @transform_2, window_bounds = array<i64: 1, 5, 1>}]} {
    %c0_i32 = arith.constant 0 : i32
    %0 = arith.cmpi eq, %arg1, %c0_i32 : i32
    %1 = arith.extui %0 : i1 to i32
    %c0_i32_0 = arith.constant 0 : i32
    %2 = arith.cmpi ne, %1, %c0_i32_0 : i32
    scf.if %2 {
      %cst = arith.constant 0.000000e+00 : f32
      %8 = vector.broadcast %cst : f32 to vector<1x5x1xf32>
      %c0 = arith.constant 0 : index
      %c0_3 = arith.constant 0 : index
      %c0_4 = arith.constant 0 : index
      %9 = vector.load %arg4[%c0, %c0_3, %c0_4] : memref<1x5x1xf32, #tpu.memory_space<vmem>>, vector<1x5x1xf32>
      tpu.vector_store %arg4[%c0, %c0_3, %c0_4], %8 {strides = array<i32>} : memref<1x5x1xf32, #tpu.memory_space<vmem>>, vector<1x5x1xf32>,
    } else {
    }
    %c1_i32 = arith.constant 1 : i32
    %3 = arith.muli %arg0, %c1_i32 : i32
    %4 = arith.addi %3, %arg1 : i32
    %c1_i32_1 = arith.constant 1 : i32
    %5 = arith.cmpi slt, %4, %c1_i32_1 : i32
    %6 = arith.extui %5 : i1 to i32
    %c0_i32_2 = arith.constant 0 : i32
    %7 = arith.cmpi ne, %6, %c0_i32_2 : i32
    scf.if %7 {
      %c0 = arith.constant 0 : index
      %c0_3 = arith.constant 0 : index
      %8 = vector.load %arg2[%c0, %c0_3] : memref<8x32xf32, #tpu.memory_space<vmem>>, vector<8x32xf32>
      %c0_4 = arith.constant 0 : index
      %c0_5 = arith.constant 0 : index
      %9 = vector.load %arg3[%c0_4, %c0_5] : memref<8x32xf32, #tpu.memory_space<vmem>>, vector<8x32xf32>
      %cst = arith.constant dense<0.000000e+00> : vector<32xf32>
      %10 = vector.multi_reduction <add>, %8, %cst [0] : vector<8x32xf32> to vector<32xf32>
      %11 = vector.shape_cast %10 : vector<32xf32> to vector<1x32xf32>
      %cst_6 = arith.constant 1.250000e-01 : f32
      %12 = vector.broadcast %cst_6 : f32 to vector<1x32xf32>
      %13 = arith.mulf %11, %12 : vector<1x32xf32>
      %cst_7 = arith.constant dense<0.000000e+00> : vector<32xf32>
      %14 = vector.multi_reduction <add>, %9, %cst_7 [0] : vector<8x32xf32> to vector<32xf32>
      %15 = vector.shape_cast %14 : vector<32xf32> to vector<1x32xf32>
      %cst_8 = arith.constant 1.250000e-01 : f32
      %16 = vector.broadcast %cst_8 : f32 to vector<1x32xf32>
      %17 = arith.mulf %15, %16 : vector<1x32xf32>
      %18 = vector.broadcast %13 : vector<1x32xf32> to vector<8x32xf32>
      %19 = arith.subf %8, %18 : vector<8x32xf32>
      %20 = vector.broadcast %17 : vector<1x32xf32> to vector<8x32xf32>
      %21 = arith.subf %9, %20 : vector<8x32xf32>
      %22 = arith.subf %13, %17 : vector<1x32xf32>
      %23 = arith.mulf %22, %22 : vector<1x32xf32>
      %24 = arith.mulf %19, %19 : vector<8x32xf32>
      %25 = arith.mulf %21, %21 : vector<8x32xf32>
      %cst_9 = arith.constant dense<0.000000e+00> : vector<32xf32>
      %26 = vector.multi_reduction <add>, %24, %cst_9 [0] : vector<8x32xf32> to vector<32xf32>
      %27 = vector.shape_cast %26 : vector<32xf32> to vector<1x32xf32>
      %cst_10 = arith.constant dense<0.000000e+00> : vector<32xf32>
      %28 = vector.multi_reduction <add>, %25, %cst_10 [0] : vector<8x32xf32> to vector<32xf32>
      %29 = vector.shape_cast %28 : vector<32xf32> to vector<1x32xf32>
      %30 = arith.subf %27, %29 : vector<1x32xf32>
      %cst_11 = arith.constant 1.250000e-01 : f32
      %31 = vector.broadcast %cst_11 : f32 to vector<1x32xf32>
      %32 = arith.mulf %30, %31 : vector<1x32xf32>
      %33 = arith.mulf %32, %32 : vector<1x32xf32>
      %34 = arith.mulf %24, %19 : vector<8x32xf32>
      %35 = arith.mulf %25, %21 : vector<8x32xf32>
      %cst_12 = arith.constant dense<0.000000e+00> : vector<32xf32>
      %36 = vector.multi_reduction <add>, %34, %cst_12 [0] : vector<8x32xf32> to vector<32xf32>
      %37 = vector.shape_cast %36 : vector<32xf32> to vector<1x32xf32>
      %cst_13 = arith.constant dense<0.000000e+00> : vector<32xf32>
      %38 = vector.multi_reduction <add>, %35, %cst_13 [0] : vector<8x32xf32> to vector<32xf32>
      %39 = vector.shape_cast %38 : vector<32xf32> to vector<1x32xf32>
      %40 = arith.subf %37, %39 : vector<1x32xf32>
      %cst_14 = arith.constant 1.250000e-01 : f32
      %41 = vector.broadcast %cst_14 : f32 to vector<1x32xf32>
      %42 = arith.mulf %40, %41 : vector<1x32xf32>
      %43 = arith.mulf %42, %42 : vector<1x32xf32>
      %44 = arith.mulf %34, %19 : vector<8x32xf32>
      %45 = arith.mulf %35, %21 : vector<8x32xf32>
      %cst_15 = arith.constant dense<0.000000e+00> : vector<32xf32>
      %46 = vector.multi_reduction <add>, %44, %cst_15 [0] : vector<8x32xf32> to vector<32xf32>
      %47 = vector.shape_cast %46 : vector<32xf32> to vector<1x32xf32>
      %cst_16 = arith.constant dense<0.000000e+00> : vector<32xf32>
      %48 = vector.multi_reduction <add>, %45, %cst_16 [0] : vector<8x32xf32> to vector<32xf32>
      %49 = vector.shape_cast %48 : vector<32xf32> to vector<1x32xf32>
      %50 = arith.subf %47, %49 : vector<1x32xf32>
      %cst_17 = arith.constant 1.250000e-01 : f32
      %51 = vector.broadcast %cst_17 : f32 to vector<1x32xf32>
      %52 = arith.mulf %50, %51 : vector<1x32xf32>
      %53 = arith.mulf %52, %52 : vector<1x32xf32>
      %54 = arith.mulf %44, %19 : vector<8x32xf32>
      %55 = arith.mulf %45, %21 : vector<8x32xf32>
      %cst_18 = arith.constant dense<0.000000e+00> : vector<32xf32>
      %56 = vector.multi_reduction <add>, %54, %cst_18 [0] : vector<8x32xf32> to vector<32xf32>
      %57 = vector.shape_cast %56 : vector<32xf32> to vector<1x32xf32>
      %cst_19 = arith.constant dense<0.000000e+00> : vector<32xf32>
      %58 = vector.multi_reduction <add>, %55, %cst_19 [0] : vector<8x32xf32> to vector<32xf32>
      %59 = vector.shape_cast %58 : vector<32xf32> to vector<1x32xf32>
      %60 = arith.subf %57, %59 : vector<1x32xf32>
      %cst_20 = arith.constant 1.250000e-01 : f32
      %61 = vector.broadcast %cst_20 : f32 to vector<1x32xf32>
      %62 = arith.mulf %60, %61 : vector<1x32xf32>
      %63 = arith.mulf %62, %62 : vector<1x32xf32>
      %64 = tpu.concatenate %23, %33, %43, %53, %63 in 0 : vector<1x32xf32>, vector<1x32xf32>, vector<1x32xf32>, vector<1x32xf32>, vector<1x32xf32> -> vector<5x32xf32>
      %cst_21 = arith.constant dense<0.000000e+00> : vector<5xf32>
      %65 = vector.multi_reduction <add>, %64, %cst_21 [1] : vector<5x32xf32> to vector<5xf32>
      %66 = vector.shape_cast %65 : vector<5xf32> to vector<5x1xf32>
      %c0_22 = arith.constant 0 : index
      %c0_23 = arith.constant 0 : index
      %c0_24 = arith.constant 0 : index
      %67 = vector.load %arg4[%c0_22, %c0_23, %c0_24] : memref<1x5x1xf32, #tpu.memory_space<vmem>>, vector<1x5x1xf32>
      %68 = vector.shape_cast %66 : vector<5x1xf32> to vector<1x5x1xf32>
      %69 = arith.addf %67, %68 : vector<1x5x1xf32>
      %c0_25 = arith.constant 0 : index
      %c0_26 = arith.constant 0 : index
      %c0_27 = arith.constant 0 : index
      %70 = vector.load %arg4[%c0_25, %c0_26, %c0_27] : memref<1x5x1xf32, #tpu.memory_space<vmem>>, vector<1x5x1xf32>
      tpu.vector_store %arg4[%c0_25, %c0_26, %c0_27], %69 {strides = array<i32>} : memref<1x5x1xf32, #tpu.memory_space<vmem>>, vector<1x5x1xf32>,
    } else {
    }
    return
  }
  func.func @transform_0(%arg0: i32, %arg1: i32) -> (i32, i32) {
    %c1_i32 = arith.constant 1 : i32
    %0 = arith.muli %arg0, %c1_i32 : i32
    %1 = arith.addi %0, %arg1 : i32
    %c0_i32 = arith.constant 0 : i32
    %2 = arith.minsi %1, %c0_i32 : i32
    %c0_i32_0 = arith.constant 0 : i32
    %c0_i32_1 = arith.constant 0 : i32
    return %c0_i32_0, %2 : i32, i32
  }
  func.func @transform_1(%arg0: i32, %arg1: i32) -> (i32, i32) {
    %c1_i32 = arith.constant 1 : i32
    %0 = arith.muli %arg0, %c1_i32 : i32
    %1 = arith.addi %0, %arg1 : i32
    %c0_i32 = arith.constant 0 : i32
    %2 = arith.minsi %1, %c0_i32 : i32
    %c0_i32_0 = arith.constant 0 : i32
    %c0_i32_1 = arith.constant 0 : i32
    return %c0_i32_0, %2 : i32, i32
  }
  func.func @transform_2(%arg0: i32, %arg1: i32) -> (i32, i32, i32) {
    %c0_i32 = arith.constant 0 : i32
    %c0_i32_0 = arith.constant 0 : i32
    %c0_i32_1 = arith.constant 0 : i32
    return %arg0, %c0_i32, %c0_i32_0 : i32, i32, i32
  }
}

</mosaic_0001>

<llo_original>
// kernel: tpu_custom_call.1
$region0: #{tpu_custom_call.1}
  #allocation0 [shape = 'u32[]', space=smem, size = 0x4, offset = 0x4, fixed_abs, tag = 'smem constant byte address 0x4 - core index']
  #allocation1 [shape = 'u32[72,128]{1,0:T(1,128)}', space=vmem, size = 0x9000, scoped, tag = 'internal scratch']
  %s0 = inlined_call_operand.hbm [shape: f32[8,32], index: 0, kind: input, shape index: {}]
  %s1 = inlined_call_operand.hbm [shape: f32[8,32], index: 1, kind: input, shape index: {}]
  %s2 = inlined_call_operand.vmem [shape: f32[1,5,1], index: 2, kind: output, shape index: {}]
  %s3 = sld [smem:[#allocation0]]
  $region34: #{tpu_custom_call.1} parent=0
    _
  %s5 = ssub.s32 1, %s3
  %s6 = scalar_select 0, %s5, %s3
  $region1: #{tpu_custom_call.1} parent=0
    #allocation2 [shape = 'u8[4096]{0}', space=vmem, size = 0x1000, scoped, tag = 'input window, operand 0, single buffered']
    #allocation3 [shape = 's32[1]{0}', space=sflag, size = 0x4, scoped, tag = 'scoped memory for tpu_custom_call.1']
    #allocation4 [shape = 'u8[4096]{0}', space=vmem, size = 0x1000, scoped, tag = 'input window, operand 1, single buffered']
    #allocation5 [shape = 's32[1]{0}', space=sflag, size = 0x4, scoped, tag = 'scoped memory for tpu_custom_call.1']
    %7 = vsyncpa [#allocation3], 0
    %8 = vsyncpa [#allocation5], 0
    // Predicated region
    $region2: #{tpu_custom_call.1} parent=1 // pred_check
      _
    $region3: #{tpu_custom_call.1} parent=1 // pred_check_branch
      %10 = sbr.rel (0) target = $region5
    $region4: #{tpu_custom_call.1} parent=1 // pred_region
      %s11 = sadd.s32 0, 0
      %p12 = scmp.lt.s32.totalorder %s11, 0
      %s13 = scalar_select %p12, %s11, 0
      %15 = vsyncadd [#allocation3], 0
      %s16 = smul.addr %s13, 8
      %s17 = scalar_lea.hbm %s0, %s16
      %s19 = sshll.u32 %s17, 4
      %s20 = int_to_ptr.hbm [resolvable:$true] %s19
      %s21 = sshll.u32 [#allocation2], 4
      %s22 = int_to_ptr.vmem [resolvable:$true] %s21
      %24 = dma.hbm_to_vmem [thread:$0]  %s20, 128, %s22, [#allocation3]
    $region5: #{tpu_custom_call.1} parent=1 // pred_fallthru
      _
    // Predicated region
    $region6: #{tpu_custom_call.1} parent=1 // pred_check
      _
    $region7: #{tpu_custom_call.1} parent=1 // pred_check_branch
      %26 = sbr.rel (0) target = $region9
    $region8: #{tpu_custom_call.1} parent=1 // pred_region
      %s27 = sadd.s32 0, 0
      %p28 = scmp.lt.s32.totalorder %s27, 0
      %s29 = scalar_select %p28, %s27, 0
      %31 = vsyncadd [#allocation5], 0
      %s32 = smul.addr %s29, 8
      %s33 = scalar_lea.hbm %s1, %s32
      %s35 = sshll.u32 %s33, 4
      %s36 = int_to_ptr.hbm [resolvable:$true] %s35
      %s37 = sshll.u32 [#allocation4], 4
      %s38 = int_to_ptr.vmem [resolvable:$true] %s37
      %40 = dma.hbm_to_vmem [thread:$0]  %s36, 128, %s38, [#allocation5]
    $region9: #{tpu_custom_call.1} parent=1 // pred_fallthru
      _
    // Predicated region
    $region10: #{tpu_custom_call.1} parent=1 // pred_check
      _
    $region11: #{tpu_custom_call.1} parent=1 // pred_check_branch
      %42 = sbr.rel (0) target = $region13
    $region12: #{tpu_custom_call.1} parent=1 // pred_region
      %44 = dma.done [#allocation3], 128
    $region13: #{tpu_custom_call.1} parent=1 // pred_fallthru
      _
    // Predicated region
    $region14: #{tpu_custom_call.1} parent=1 // pred_check
      _
    $region15: #{tpu_custom_call.1} parent=1 // pred_check_branch
      %46 = sbr.rel (0) target = $region17
    $region16: #{tpu_custom_call.1} parent=1 // pred_region
      %48 = dma.done [#allocation5], 128
    $region17: #{tpu_custom_call.1} parent=1 // pred_fallthru
      _
    %s49 = sadd.s32 0, 0
    %p50 = scmp.lt.s32.totalorder %s49, 0
    %s51 = scalar_select %p50, %s49, 0
    %s52 = sadd.s32 0, 0
    %p53 = scmp.lt.s32.totalorder %s52, 0
    %s54 = scalar_select %p53, %s52, 0
    %p55 = scmp.eq.s32.totalorder 0, 0
    // Predicated region
    $region18: #{tpu_custom_call.1} parent=1 // pred_check
      %p56 = pneg %p55
    $region19: #{tpu_custom_call.1} parent=1 // pred_check_branch
      %58 = sbr.rel (%p56) target = $region21
    $region20: #{tpu_custom_call.1} parent=1 // pred_region
      %vm59 = vcmask 4096
      %60 = vst.msk [vmem:[%s2] sm:$0x1f] %vm59, 0.0
    $region21: #{tpu_custom_call.1} parent=1 // pred_fallthru
      _
    %s61 = sadd.s32 0, 0
    %p62 = scmp.lt.s32.totalorder %s61, 1
    // Predicated region
    $region22: #{tpu_custom_call.1} parent=1 // pred_check
      %p63 = pneg %p62
    $region23: #{tpu_custom_call.1} parent=1 // pred_check_branch
      %65 = sbr.rel (%p63) target = $region25
    $region24: #{tpu_custom_call.1} parent=1 // pred_region
      %v66 = vld [vmem:[#allocation2] sm:$0xff]
      %v67 = vld [vmem:[#allocation4] sm:$0xff]
      %vm68 = vcmask 261120
      %v69 = vsel %vm68, %v66, 0.0
      %v70 = vrot.slane %v69, 4
      %v71 = vadd.f32 %v69, %v70
      %v72 = vrot.slane %v71, 2
      %v73 = vadd.f32 %v71, %v72
      %v74 = vrot.slane %v73, 1
      %v75 = vadd.f32 %v73, %v74
      %v76 = vmul.f32 %v75, 0.125
      %v77 = vsel %vm68, %v67, 0.0
      %v78 = vrot.slane %v77, 4
      %v79 = vadd.f32 %v77, %v78
      %v80 = vrot.slane %v79, 2
      %v81 = vadd.f32 %v79, %v80
      %v82 = vrot.slane %v81, 1
      %v83 = vadd.f32 %v81, %v82
      %v84 = vmul.f32 %v83, 0.125
      %v85 = vsub.f32 %v66, %v76
      %v86 = vsub.f32 %v67, %v84
      %v87 = vsub.f32 %v76, %v84
      %v88 = vmul.f32 %v87, %v87
      %v89 = vmul.f32 %v85, %v85
      %v90 = vmul.f32 %v86, %v86
      %v91 = vsel %vm68, %v89, 0.0
      %v92 = vrot.slane %v91, 4
      %v93 = vadd.f32 %v91, %v92
      %v94 = vrot.slane %v93, 2
      %v95 = vadd.f32 %v93, %v94
      %v96 = vrot.slane %v95, 1
      %v97 = vadd.f32 %v95, %v96
      %v98 = vsel %vm68, %v90, 0.0
      %v99 = vrot.slane %v98, 4
      %v100 = vadd.f32 %v98, %v99
      %v101 = vrot.slane %v100, 2
      %v102 = vadd.f32 %v100, %v101
      %v103 = vrot.slane %v102, 1
      %v104 = vadd.f32 %v102, %v103
      %v105 = vsub.f32 %v97, %v104
      %v106 = vmul.f32 %v105, 0.125
      %v107 = vmul.f32 %v106, %v106
      %v108 = vmul.f32 %v89, %v85
      %v109 = vmul.f32 %v90, %v86
      %v110 = vsel %vm68, %v108, 0.0
      %v111 = vrot.slane %v110, 4
      %v112 = vadd.f32 %v110, %v111
      %v113 = vrot.slane %v112, 2
      %v114 = vadd.f32 %v112, %v113
      %v115 = vrot.slane %v114, 1
      %v116 = vadd.f32 %v114, %v115
      %v117 = vsel %vm68, %v109, 0.0
      %v118 = vrot.slane %v117, 4
      %v119 = vadd.f32 %v117, %v118
      %v120 = vrot.slane %v119, 2
      %v121 = vadd.f32 %v119, %v120
      %v122 = vrot.slane %v121, 1
      %v123 = vadd.f32 %v121, %v122
      %v124 = vsub.f32 %v116, %v123
      %v125 = vmul.f32 %v124, 0.125
      %v126 = vmul.f32 %v125, %v125
      %v127 = vmul.f32 %v108, %v85
      %v128 = vmul.f32 %v109, %v86
      %v129 = vsel %vm68, %v127, 0.0
      %v130 = vrot.slane %v129, 4
      %v131 = vadd.f32 %v129, %v130
      %v132 = vrot.slane %v131, 2
      %v133 = vadd.f32 %v131, %v132
      %v134 = vrot.slane %v133, 1
      %v135 = vadd.f32 %v133, %v134
      %v136 = vsel %vm68, %v128, 0.0
      %v137 = vrot.slane %v136, 4
      %v138 = vadd.f32 %v136, %v137
      %v139 = vrot.slane %v138, 2
      %v140 = vadd.f32 %v138, %v139
      %v141 = vrot.slane %v140, 1
      %v142 = vadd.f32 %v140, %v141
      %v143 = vsub.f32 %v135, %v142
      %v144 = vmul.f32 %v143, 0.125
      %v145 = vmul.f32 %v144, %v144
      %v146 = vmul.f32 %v127, %v85
      %v147 = vmul.f32 %v128, %v86
      %v148 = vsel %vm68, %v146, 0.0
      %v149 = vrot.slane %v148, 4
      %v150 = vadd.f32 %v148, %v149
      %v151 = vrot.slane %v150, 2
      %v152 = vadd.f32 %v150, %v151
      %v153 = vrot.slane %v152, 1
      %v154 = vadd.f32 %v152, %v153
      %v155 = vsel %vm68, %v147, 0.0
      %v156 = vrot.slane %v155, 4
      %v157 = vadd.f32 %v155, %v156
      %v158 = vrot.slane %v157, 2
      %v159 = vadd.f32 %v157, %v158
      %v160 = vrot.slane %v159, 1
      %v161 = vadd.f32 %v159, %v160
      %v162 = vsub.f32 %v154, %v161
      %v163 = vmul.f32 %v162, 0.125
      %v164 = vmul.f32 %v163, %v163
      %vm165 = vcmask 1040384
      %v166 = vsel %vm165, %v88, %v107
      %vm167 = vcmask 1041408
      %v168 = vsel %vm167, %v166, %v126
      %vm169 = vcmask 1042432
      %v170 = vsel %vm169, %v168, %v145
      %vm171 = vcmask 1043456
      %v172 = vsel %vm171, %v170, %v164
      %vm173 = vcmask 258048
      %v174 = vsel %vm173, %v172, 0.0
      %175 = vadd.xlane.f32.xlu0 %v174
      %v176 = vpop.xlane.xlu0 %175
      %v177 = vld [vmem:[%s2] sm:$0x1f]
      %v178 = vadd.f32 %v177, %v176
      %vm179 = vcmask 4096
      %180 = vst.msk [vmem:[%s2] sm:$0x1f] %vm179, %v178
    $region25: #{tpu_custom_call.1} parent=1 // pred_fallthru
      _
    // Predicated region
    $region26: #{tpu_custom_call.1} parent=1 // pred_check
      _
    $region27: #{tpu_custom_call.1} parent=1 // pred_check_branch
      %182 = sbr.rel (0) target = $region29
    $region28: #{tpu_custom_call.1} parent=1 // pred_region
      _
    $region29: #{tpu_custom_call.1} parent=1 // pred_fallthru
      _
    // Predicated region
    $region30: #{tpu_custom_call.1} parent=1 // pred_check
      _
    $region31: #{tpu_custom_call.1} parent=1 // pred_check_branch
      %184 = sbr.rel (0) target = $region33
    $region32: #{tpu_custom_call.1} parent=1 // pred_region
      _
    $region33: #{tpu_custom_call.1} parent=1 // pred_fallthru
      _
    %185 = vsyncpa [#allocation3], 1
    %186 = vsyncpa [#allocation5], 1

</llo_original>
